<compile_context>
chip_gen: v5e
topology: v5e:2x2
jax: 0.10.0
libtpu: 0.0.40
codegen_flags: <defaults>
</compile_context>

<pallas_src>
import jax
import jax.numpy as jnp
from jax import lax
from jax.experimental import pallas as pl
from jax.experimental.pallas import tpu as pltpu


# ----------------------------------------------------------------------------
# Kernel
# ----------------------------------------------------------------------------
def _tensor_seq2mat_kernel(xv_ref, xwx_ref, ywyb_ref, y_ref, wv_ref, o_ref,
                           xvy_sc):
    # xv_ref  : [1, TI, K, H]   xv[b,i,k,:]  = x[b,i,:] @ V[k]       (precomputed, MXU dtype)
    # xwx_ref : [1, TI, H]      xwx[b,i,:]   = x[b,i,:] @ Wx         (precomputed, f32)
    # ywyb_ref: [1, TJ, H]      ywyb[b,j,:]  = y[b,j,:] @ Wy + bias  (precomputed, f32)
    # y_ref   : [1, TJ, H]      (MXU dtype)
    # wv_ref  : [K, H]          bilinear -> hidden slice of the Linear (MXU dtype)
    # o_ref   : [1, TI, TJ, H]  output tile (rows i, cols j)
    # xvy_sc  : [TI*TJ, K] f32  VMEM scratch collecting the bilinear terms
    TI = xv_ref.shape[1]
    TJ = y_ref.shape[1]
    H = y_ref.shape[2]

    yb = y_ref[0]          # [TJ, H]
    wv = wv_ref[...]       # [K, H]

    # 1) Bilinear left half: one skinny matmul per i-row of the tile; results
    #    are batched into the scratch so the projection below is one matmul.
    #    Static offsets (multiples of TJ, TJ % 8 == 0) -> aligned stores.
    for t in range(TI):
        xvy_sc[t * TJ:(t + 1) * TJ, :] = lax.dot_general(
            yb, xv_ref[0, t], (((1,), (1,)), ((), ())),
            preferred_element_type=jnp.float32)              # [TJ, K]

    # 2) Single batched K->H projection for the whole (TI, TJ) tile.
    proj = jnp.dot(xvy_sc[...].astype(wv.dtype), wv,
                   preferred_element_type=jnp.float32)        # [TI*TJ, H]

    # 3) Fused broadcast-add of the hoisted Linear halves (bias folded into
    #    ywyb) + ReLU, one store of the whole tile.
    out = (proj.reshape(TI, TJ, H)
           + xwx_ref[0][:, None, :]        # broadcast over j
           + ywyb_ref[0][None, :, :])      # broadcast over i
    o_ref[0] = jnp.maximum(out, 0.0).astype(o_ref.dtype)      # relu


# ----------------------------------------------------------------------------
# Tile selection / VMEM accounting
# ----------------------------------------------------------------------------
def _round_up(a, m):
    return (a + m - 1) // m * m


def _vmem_block_bytes(shape, itemsize):
    """Approx VMEM bytes of a block, including (8, 128) tile padding."""
    lead = 1
    for d in shape[:-2]:
        lead *= d
    return lead * _round_up(shape[-2], 8) * _round_up(shape[-1], 128) * itemsize


def _footprint_bytes(ti, tj, H, K, out_isize, mxu_isize):
    fp = 0
    fp += 2 * _vmem_block_bytes((ti, tj, H), out_isize)   # out tile (double-buffered)
    fp += 2 * _vmem_block_bytes((ti, K, H), mxu_isize)    # xv tile
    fp += 2 * _vmem_block_bytes((ti, H), 4)               # x @ Wx tile (f32)
    fp += 2 * _vmem_block_bytes((tj, H), 4)               # y @ Wy + b tile (f32)
    fp += 2 * _vmem_block_bytes((tj, H), mxu_isize)       # y tile
    fp += 2 * _vmem_block_bytes((K, H), mxu_isize)        # Wv
    fp += _vmem_block_bytes((ti * tj, K), 4)              # xvy scratch (single)
    return fp


def _pick_tiles(L, H, K, out_isize, mxu_isize, budget, max_unroll=128):
    """Pick (TI, TJ) among divisors of L satisfying the (8,128) rule, maximizing
    the output slab within the VMEM budget (never silently falls back to L)."""
    valid = [d for d in range(1, L + 1)
             if L % d == 0 and (d == L or d % 8 == 0)]
    valid_i = [d for d in valid if d <= max_unroll] or valid
    best = None
    for ti in valid_i:
        for tj in valid:
            fp = _footprint_bytes(ti, tj, H, K, out_isize, mxu_isize)
            if fp > budget:
                continue
            # Bigger slab first (amortizes ~0.35us/step + j-side re-reads),
            # then prefer larger TI (fewer refetches of the j-side blocks).
            score = (ti * tj, ti, tj)
            if best is None or score > best[0]:
                best = (score, ti, tj, fp)
    if best is None:
        raise ValueError(
            f"TensorSeq2Mat: no (block_i, block_j) tiling of L={L} fits a "
            f"{budget // (1 << 20)} MiB VMEM budget; pad L to a multiple of 8 "
            f"or raise vmem_budget_bytes.")
    return best[1], best[2], best[3]


# ----------------------------------------------------------------------------
# Wrapper
# ----------------------------------------------------------------------------
def tensor_seq2mat(x, y, V, w, b, *, block_i=None, block_j=None,
                   mxu_dtype=jnp.bfloat16, out_dtype=None,
                   vmem_budget_bytes=48 << 20):
    """x, y: [B, L, H]; V: [K, H, H]; w: [2H+K, H] (Linear weight, transposed);
    b: [H]  ->  [B, L, L, H] with dtype `out_dtype` (default: x.dtype)."""
    B, L, H = x.shape
    K = V.shape[0]
    assert w.shape == (2 * H + K, H) and b.shape == (H,)
    out_dtype = x.dtype if out_dtype is None else out_dtype
    out_isize = jnp.dtype(out_dtype).itemsize
    mxu_isize = jnp.dtype(mxu_dtype).itemsize

    wx, wy, wv = w[:H], w[H:2 * H], w[2 * H:]

    # Hoisted, i-/j-invariant precomputes (plain XLA, O(B*L) work); the kernel
    # keeps only the O(L^2) work.  MXU operands in bf16, add operands in f32.
    xwx = jnp.einsum('blh,hp->blp', x, wx).astype(jnp.float32)           # [B, L, H]
    ywyb = (jnp.einsum('blh,hp->blp', y, wy) + b).astype(jnp.float32)    # [B, L, H]
    xv = jnp.einsum('blp,kpd->blkd', x, V).astype(mxu_dtype)             # [B, L, K, H]
    y_mx = y.astype(mxu_dtype)
    wv_mx = wv.astype(mxu_dtype)

    if block_i is None or block_j is None:
        ti, tj, _ = _pick_tiles(L, H, K, out_isize, mxu_isize, vmem_budget_bytes)
        block_i = ti if block_i is None else block_i
        block_j = tj if block_j is None else block_j
    TI, TJ = block_i, block_j
    assert L % TI == 0 and (TI == L or TI % 8 == 0), (L, TI)
    assert L % TJ == 0 and (TJ == L or TJ % 8 == 0), (L, TJ)

    fp = _footprint_bytes(TI, TJ, H, K, out_isize, mxu_isize)
    vmem_limit = int(min(max(fp + (8 << 20), 32 << 20), 100 << 20))

    cost = pl.CostEstimate(
        flops=4 * B * L * L * K * H,
        transcendentals=0,
        bytes_accessed=(B * L * L * H * out_isize            # output writeback
                        + B * L * K * H * mxu_isize          # xv
                        + B * L * H * (mxu_isize + 8)        # y, ywyb, xwx
                        + K * H * mxu_isize))

    out = pl.pallas_call(
        _tensor_seq2mat_kernel,
        out_shape=jax.ShapeDtypeStruct((B, L, L, H), out_dtype),
        grid_spec=pltpu.PrefetchScalarGridSpec(
            num_scalar_prefetch=0,
            grid=(B, L // TI, L // TJ),
            in_specs=[
                # i-side blocks: index ignores the inner j axis -> kept resident
                pl.BlockSpec((1, TI, K, H), lambda bi, ii, ji: (bi, ii, 0, 0)),
                pl.BlockSpec((1, TI, H), lambda bi, ii, ji: (bi, ii, 0)),
                # j-side blocks (tiled so long L fits v7x's 64 MiB VMEM)
                pl.BlockSpec((1, TJ, H), lambda bi, ii, ji: (bi, ji, 0)),
                pl.BlockSpec((1, TJ, H), lambda bi, ii, ji: (bi, ji, 0)),
                # grid-invariant weight slice
                pl.BlockSpec((K, H), lambda bi, ii, ji: (0, 0)),
            ],
            out_specs=pl.BlockSpec((1, TI, TJ, H),
                                   lambda bi, ii, ji: (bi, ii, ji, 0)),
            scratch_shapes=[pltpu.VMEM((TI * TJ, K), jnp.float32)],
        ),
        compiler_params=pltpu.CompilerParams(
            dimension_semantics=("parallel", "parallel", "parallel"),
            vmem_limit_bytes=vmem_limit),
        cost_estimate=cost,
    )(xv, xwx, ywyb, y_mx, wv_mx)
    return out


# ----------------------------------------------------------------------------
# Pure-JAX reference of the PyTorch forward (hidden_act = relu)
# ----------------------------------------------------------------------------
def _reference(x, y, V, w, b):
    B, L, H = x.shape
    xb = jnp.broadcast_to(x[:, :, None, :], (B, L, L, H))
    yb = jnp.broadcast_to(y[:, None, :, :], (B, L, L, H))
    xvy = jnp.einsum('bmp,kpd,bnd->bmnk', x, V, y)
    t = jnp.concatenate([xb, yb, xvy], axis=-1)              # [B, L, L, 2H+K]
    out = jnp.einsum('bmnf,fh->bmnh', t, w) + b
    return jnp.maximum(out, 0.0)


if __name__ == "__main__":
    B, L, H, K = 2, 8, 32, 4      # K = config.num_d
    key = jax.random.PRNGKey(0)
    kx, ky, kv, kw, kb = jax.random.split(key, 5)
    x = jax.random.normal(kx, (B, L, H), dtype=jnp.float32)
    y = jax.random.normal(ky, (B, L, H), dtype=jnp.float32)
    # V ~ N(0, initializer_range); nn.Linear(2H+K, H) uniform init (weight
    # stored transposed as [2H+K, H]).
    V = 0.02 * jax.random.normal(kv, (K, H, H), dtype=jnp.float32)
    bound = 1.0 / (2 * H + K) ** 0.5
    w = jax.random.uniform(kw, (2 * H + K, H), minval=-bound, maxval=bound,
                           dtype=jnp.float32)
    b = jax.random.uniform(kb, (H,), minval=-bound, maxval=bound,
                           dtype=jnp.float32)

    ref = _reference(x, y, V, w, b)

    # Precision path (f32 MXU operands, f32 output): tight semantic check.
    out_f32 = tensor_seq2mat(x, y, V, w, b,
                             mxu_dtype=jnp.float32, out_dtype=jnp.float32)
    jax.block_until_ready(out_f32)
    assert out_f32.shape == (B, L, L, H), out_f32.shape
    assert jnp.allclose(out_f32, ref, atol=1e-3, rtol=1e-3), float(
        jnp.max(jnp.abs(out_f32 - ref)))

    # Fast path (bf16 MXU operands / f32 accumulation, bf16 output): the
    # configuration recommended for production by the performance review.
    out_bf16 = tensor_seq2mat(x, y, V, w, b, out_dtype=jnp.bfloat16)
    jax.block_until_ready(out_bf16)
    assert out_bf16.shape == (B, L, L, H), out_bf16.shape
    assert out_bf16.dtype == jnp.bfloat16
    diff = jnp.max(jnp.abs(out_bf16.astype(jnp.float32) - ref))
    assert jnp.allclose(out_bf16.astype(jnp.float32), ref,
                        atol=5e-2, rtol=5e-2), float(diff)

    print("KERNEL_OK")
</pallas_src>

<mosaic_0001>
module attributes {stable_mosaic.version = 11 : i64} {
  func.func @_tensor_seq2mat_kernel(%arg0: i32, %arg1: i32, %arg2: i32, %arg3: memref<1x8x4x32xf32, #tpu.memory_space<vmem>>, %arg4: memref<1x8x32xf32, #tpu.memory_space<vmem>>, %arg5: memref<1x8x32xf32, #tpu.memory_space<vmem>>, %arg6: memref<1x8x32xf32, #tpu.memory_space<vmem>>, %arg7: memref<4x32xf32, #tpu.memory_space<vmem>>, %arg8: memref<1x8x8x32xf32, #tpu.memory_space<vmem>>, %arg9: memref<64x4xf32, #tpu.memory_space<vmem>>) attributes {dimension_semantics = [#tpu.dimension_semantics<parallel>, #tpu.dimension_semantics<parallel>, #tpu.dimension_semantics<parallel>], iteration_bounds = array<i64: 2, 1, 1>, scalar_prefetch = 0 : i64, scratch_operands = 1 : i64, tpu.core_type = #tpu.core_type<tc>, window_params = [{transform_indices = @transform_0, window_bounds = array<i64: 1, 8, 4, 32>}, {transform_indices = @transform_1, window_bounds = array<i64: 1, 8, 32>}, {transform_indices = @transform_2, window_bounds = array<i64: 1, 8, 32>}, {transform_indices = @transform_3, window_bounds = array<i64: 1, 8, 32>}, {pipeline_mode = #tpu.pipeline_mode<synchronous>, transform_indices = @transform_4, window_bounds = array<i64: 4, 32>}, {transform_indices = @transform_5, window_bounds = array<i64: 1, 8, 8, 32>}]} {
    %c0 = arith.constant 0 : index
    %c0_0 = arith.constant 0 : index
    %c0_1 = arith.constant 0 : index
    %0 = vector.load %arg6[%c0, %c0_0, %c0_1] : memref<1x8x32xf32, #tpu.memory_space<vmem>>, vector<1x8x32xf32>
    %1 = vector.shape_cast %0 : vector<1x8x32xf32> to vector<8x32xf32>
    %c0_2 = arith.constant 0 : index
    %c0_3 = arith.constant 0 : index
    %2 = vector.load %arg7[%c0_2, %c0_3] : memref<4x32xf32, #tpu.memory_space<vmem>>, vector<4x32xf32>
    %c0_4 = arith.constant 0 : index
    %c0_5 = arith.constant 0 : index
    %c0_6 = arith.constant 0 : index
    %c0_7 = arith.constant 0 : index
    %3 = vector.load %arg3[%c0_4, %c0_5, %c0_6, %c0_7] : memref<1x8x4x32xf32, #tpu.memory_space<vmem>>, vector<1x1x4x32xf32>
    %4 = vector.shape_cast %3 : vector<1x1x4x32xf32> to vector<4x32xf32>
    %cst = arith.constant dense<0.000000e+00> : vector<8x4xf32>
    %5 = tpu.matmul %1, %4, %cst {dimension_numbers = #tpu.dot_dimension_numbers<[1], [1], [0], [0], [0, 0, 1, 0], [], []>} : vector<8x32xf32>, vector<4x32xf32>, vector<8x4xf32> -> vector<8x4xf32>
    %c0_8 = arith.constant 0 : index
    %c0_9 = arith.constant 0 : index
    %6 = vector.load %arg9[%c0_8, %c0_9] : memref<64x4xf32, #tpu.memory_space<vmem>>, vector<8x4xf32>
    tpu.vector_store %arg9[%c0_8, %c0_9], %5 {strides = array<i32>} : memref<64x4xf32, #tpu.memory_space<vmem>>, vector<8x4xf32>,
    %c0_10 = arith.constant 0 : index
    %c1 = arith.constant 1 : index
    %c0_11 = arith.constant 0 : index
    %c0_12 = arith.constant 0 : index
    %7 = vector.load %arg3[%c0_10, %c1, %c0_11, %c0_12] : memref<1x8x4x32xf32, #tpu.memory_space<vmem>>, vector<1x1x4x32xf32>
    %8 = vector.shape_cast %7 : vector<1x1x4x32xf32> to vector<4x32xf32>
    %cst_13 = arith.constant dense<0.000000e+00> : vector<8x4xf32>
    %9 = tpu.matmul %1, %8, %cst_13 {dimension_numbers = #tpu.dot_dimension_numbers<[1], [1], [0], [0], [0, 0, 1, 0], [], []>} : vector<8x32xf32>, vector<4x32xf32>, vector<8x4xf32> -> vector<8x4xf32>
    %c8 = arith.constant 8 : index
    %c0_14 = arith.constant 0 : index
    %10 = vector.load %arg9[%c8, %c0_14] : memref<64x4xf32, #tpu.memory_space<vmem>>, vector<8x4xf32>
    tpu.vector_store %arg9[%c8, %c0_14], %9 {strides = array<i32>} : memref<64x4xf32, #tpu.memory_space<vmem>>, vector<8x4xf32>,
    %c0_15 = arith.constant 0 : index
    %c2 = arith.constant 2 : index
    %c0_16 = arith.constant 0 : index
    %c0_17 = arith.constant 0 : index
    %11 = vector.load %arg3[%c0_15, %c2, %c0_16, %c0_17] : memref<1x8x4x32xf32, #tpu.memory_space<vmem>>, vector<1x1x4x32xf32>
    %12 = vector.shape_cast %11 : vector<1x1x4x32xf32> to vector<4x32xf32>
    %cst_18 = arith.constant dense<0.000000e+00> : vector<8x4xf32>
    %13 = tpu.matmul %1, %12, %cst_18 {dimension_numbers = #tpu.dot_dimension_numbers<[1], [1], [0], [0], [0, 0, 1, 0], [], []>} : vector<8x32xf32>, vector<4x32xf32>, vector<8x4xf32> -> vector<8x4xf32>
    %c16 = arith.constant 16 : index
    %c0_19 = arith.constant 0 : index
    %14 = vector.load %arg9[%c16, %c0_19] : memref<64x4xf32, #tpu.memory_space<vmem>>, vector<8x4xf32>
    tpu.vector_store %arg9[%c16, %c0_19], %13 {strides = array<i32>} : memref<64x4xf32, #tpu.memory_space<vmem>>, vector<8x4xf32>,
    %c0_20 = arith.constant 0 : index
    %c3 = arith.constant 3 : index
    %c0_21 = arith.constant 0 : index
    %c0_22 = arith.constant 0 : index
    %15 = vector.load %arg3[%c0_20, %c3, %c0_21, %c0_22] : memref<1x8x4x32xf32, #tpu.memory_space<vmem>>, vector<1x1x4x32xf32>
    %16 = vector.shape_cast %15 : vector<1x1x4x32xf32> to vector<4x32xf32>
    %cst_23 = arith.constant dense<0.000000e+00> : vector<8x4xf32>
    %17 = tpu.matmul %1, %16, %cst_23 {dimension_numbers = #tpu.dot_dimension_numbers<[1], [1], [0], [0], [0, 0, 1, 0], [], []>} : vector<8x32xf32>, vector<4x32xf32>, vector<8x4xf32> -> vector<8x4xf32>
    %c24 = arith.constant 24 : index
    %c0_24 = arith.constant 0 : index
    %18 = vector.load %arg9[%c24, %c0_24] : memref<64x4xf32, #tpu.memory_space<vmem>>, vector<8x4xf32>
    tpu.vector_store %arg9[%c24, %c0_24], %17 {strides = array<i32>} : memref<64x4xf32, #tpu.memory_space<vmem>>, vector<8x4xf32>,
    %c0_25 = arith.constant 0 : index
    %c4 = arith.constant 4 : index
    %c0_26 = arith.constant 0 : index
    %c0_27 = arith.constant 0 : index
    %19 = vector.load %arg3[%c0_25, %c4, %c0_26, %c0_27] : memref<1x8x4x32xf32, #tpu.memory_space<vmem>>, vector<1x1x4x32xf32>
    %20 = vector.shape_cast %19 : vector<1x1x4x32xf32> to vector<4x32xf32>
    %cst_28 = arith.constant dense<0.000000e+00> : vector<8x4xf32>
    %21 = tpu.matmul %1, %20, %cst_28 {dimension_numbers = #tpu.dot_dimension_numbers<[1], [1], [0], [0], [0, 0, 1, 0], [], []>} : vector<8x32xf32>, vector<4x32xf32>, vector<8x4xf32> -> vector<8x4xf32>
    %c32 = arith.constant 32 : index
    %c0_29 = arith.constant 0 : index
    %22 = vector.load %arg9[%c32, %c0_29] : memref<64x4xf32, #tpu.memory_space<vmem>>, vector<8x4xf32>
    tpu.vector_store %arg9[%c32, %c0_29], %21 {strides = array<i32>} : memref<64x4xf32, #tpu.memory_space<vmem>>, vector<8x4xf32>,
    %c0_30 = arith.constant 0 : index
    %c5 = arith.constant 5 : index
    %c0_31 = arith.constant 0 : index
    %c0_32 = arith.constant 0 : index
    %23 = vector.load %arg3[%c0_30, %c5, %c0_31, %c0_32] : memref<1x8x4x32xf32, #tpu.memory_space<vmem>>, vector<1x1x4x32xf32>
    %24 = vector.shape_cast %23 : vector<1x1x4x32xf32> to vector<4x32xf32>
    %cst_33 = arith.constant dense<0.000000e+00> : vector<8x4xf32>
    %25 = tpu.matmul %1, %24, %cst_33 {dimension_numbers = #tpu.dot_dimension_numbers<[1], [1], [0], [0], [0, 0, 1, 0], [], []>} : vector<8x32xf32>, vector<4x32xf32>, vector<8x4xf32> -> vector<8x4xf32>
    %c40 = arith.constant 40 : index
    %c0_34 = arith.constant 0 : index
    %26 = vector.load %arg9[%c40, %c0_34] : memref<64x4xf32, #tpu.memory_space<vmem>>, vector<8x4xf32>
    tpu.vector_store %arg9[%c40, %c0_34], %25 {strides = array<i32>} : memref<64x4xf32, #tpu.memory_space<vmem>>, vector<8x4xf32>,
    %c0_35 = arith.constant 0 : index
    %c6 = arith.constant 6 : index
    %c0_36 = arith.constant 0 : index
    %c0_37 = arith.constant 0 : index
    %27 = vector.load %arg3[%c0_35, %c6, %c0_36, %c0_37] : memref<1x8x4x32xf32, #tpu.memory_space<vmem>>, vector<1x1x4x32xf32>
    %28 = vector.shape_cast %27 : vector<1x1x4x32xf32> to vector<4x32xf32>
    %cst_38 = arith.constant dense<0.000000e+00> : vector<8x4xf32>
    %29 = tpu.matmul %1, %28, %cst_38 {dimension_numbers = #tpu.dot_dimension_numbers<[1], [1], [0], [0], [0, 0, 1, 0], [], []>} : vector<8x32xf32>, vector<4x32xf32>, vector<8x4xf32> -> vector<8x4xf32>
    %c48 = arith.constant 48 : index
    %c0_39 = arith.constant 0 : index
    %30 = vector.load %arg9[%c48, %c0_39] : memref<64x4xf32, #tpu.memory_space<vmem>>, vector<8x4xf32>
    tpu.vector_store %arg9[%c48, %c0_39], %29 {strides = array<i32>} : memref<64x4xf32, #tpu.memory_space<vmem>>, vector<8x4xf32>,
    %c0_40 = arith.constant 0 : index
    %c7 = arith.constant 7 : index
    %c0_41 = arith.constant 0 : index
    %c0_42 = arith.constant 0 : index
    %31 = vector.load %arg3[%c0_40, %c7, %c0_41, %c0_42] : memref<1x8x4x32xf32, #tpu.memory_space<vmem>>, vector<1x1x4x32xf32>
    %32 = vector.shape_cast %31 : vector<1x1x4x32xf32> to vector<4x32xf32>
    %cst_43 = arith.constant dense<0.000000e+00> : vector<8x4xf32>
    %33 = tpu.matmul %1, %32, %cst_43 {dimension_numbers = #tpu.dot_dimension_numbers<[1], [1], [0], [0], [0, 0, 1, 0], [], []>} : vector<8x32xf32>, vector<4x32xf32>, vector<8x4xf32> -> vector<8x4xf32>
    %c56 = arith.constant 56 : index
    %c0_44 = arith.constant 0 : index
    %34 = vector.load %arg9[%c56, %c0_44] : memref<64x4xf32, #tpu.memory_space<vmem>>, vector<8x4xf32>
    tpu.vector_store %arg9[%c56, %c0_44], %33 {strides = array<i32>} : memref<64x4xf32, #tpu.memory_space<vmem>>, vector<8x4xf32>,
    %c0_45 = arith.constant 0 : index
    %c0_46 = arith.constant 0 : index
    %35 = vector.load %arg9[%c0_45, %c0_46] : memref<64x4xf32, #tpu.memory_space<vmem>>, vector<64x4xf32>
    %cst_47 = arith.constant dense<0.000000e+00> : vector<64x32xf32>
    %36 = tpu.matmul %35, %2, %cst_47 {dimension_numbers = #tpu.dot_dimension_numbers<[1], [0], [0], [1], [0, 0, 1, 1], [], []>} : vector<64x4xf32>, vector<4x32xf32>, vector<64x32xf32> -> vector<64x32xf32>
    %37 = vector.shape_cast %36 : vector<64x32xf32> to vector<8x8x32xf32>
    %c0_48 = arith.constant 0 : index
    %c0_49 = arith.constant 0 : index
    %c0_50 = arith.constant 0 : index
    %38 = vector.load %arg4[%c0_48, %c0_49, %c0_50] : memref<1x8x32xf32, #tpu.memory_space<vmem>>, vector<1x8x32xf32>
    %39 = vector.shape_cast %38 : vector<1x8x32xf32> to vector<8x32xf32>
    %40 = vector.shape_cast %39 : vector<8x32xf32> to vector<8x1x32xf32>
    %41 = vector.broadcast %40 : vector<8x1x32xf32> to vector<8x8x32xf32>
    %42 = arith.addf %37, %41 : vector<8x8x32xf32>
    %c0_51 = arith.constant 0 : index
    %c0_52 = arith.constant 0 : index
    %c0_53 = arith.constant 0 : index
    %43 = vector.load %arg5[%c0_51, %c0_52, %c0_53] : memref<1x8x32xf32, #tpu.memory_space<vmem>>, vector<1x8x32xf32>
    %44 = vector.shape_cast %43 : vector<1x8x32xf32> to vector<8x32xf32>
    %45 = vector.shape_cast %44 : vector<8x32xf32> to vector<1x8x32xf32>
    %46 = vector.broadcast %45 : vector<1x8x32xf32> to vector<8x8x32xf32>
    %47 = arith.addf %42, %46 : vector<8x8x32xf32>
    %cst_54 = arith.constant 0.000000e+00 : f32
    %48 = vector.broadcast %cst_54 : f32 to vector<8x8x32xf32>
    %49 = arith.maximumf %47, %48 : vector<8x8x32xf32>
    %c0_55 = arith.constant 0 : index
    %c0_56 = arith.constant 0 : index
    %c0_57 = arith.constant 0 : index
    %c0_58 = arith.constant 0 : index
    %50 = vector.load %arg8[%c0_55, %c0_56, %c0_57, %c0_58] : memref<1x8x8x32xf32, #tpu.memory_space<vmem>>, vector<1x8x8x32xf32>
    %51 = vector.shape_cast %50 : vector<1x8x8x32xf32> to vector<8x8x32xf32>
    %52 = vector.shape_cast %49 : vector<8x8x32xf32> to vector<1x8x8x32xf32>
    tpu.vector_store %arg8[%c0_55, %c0_56, %c0_57, %c0_58], %52 {strides = array<i32>} : memref<1x8x8x32xf32, #tpu.memory_space<vmem>>, vector<1x8x8x32xf32>,
    return
  }
  func.func @transform_0(%arg0: i32, %arg1: i32, %arg2: i32) -> (i32, i32, i32, i32) {
    %c0_i32 = arith.constant 0 : i32
    %c0_i32_0 = arith.constant 0 : i32
    %c0_i32_1 = arith.constant 0 : i32
    return %arg0, %arg1, %c0_i32, %c0_i32_0 : i32, i32, i32, i32
  }
  func.func @transform_1(%arg0: i32, %arg1: i32, %arg2: i32) -> (i32, i32, i32) {
    %c0_i32 = arith.constant 0 : i32
    %c0_i32_0 = arith.constant 0 : i32
    return %arg0, %arg1, %c0_i32 : i32, i32, i32
  }
  func.func @transform_2(%arg0: i32, %arg1: i32, %arg2: i32) -> (i32, i32, i32) {
    %c0_i32 = arith.constant 0 : i32
    %c0_i32_0 = arith.constant 0 : i32
    return %arg0, %arg2, %c0_i32 : i32, i32, i32
  }
  func.func @transform_3(%arg0: i32, %arg1: i32, %arg2: i32) -> (i32, i32, i32) {
    %c0_i32 = arith.constant 0 : i32
    %c0_i32_0 = arith.constant 0 : i32
    return %arg0, %arg2, %c0_i32 : i32, i32, i32
  }
  func.func @transform_4(%arg0: i32, %arg1: i32, %arg2: i32) -> (i32, i32) {
    %c0_i32 = arith.constant 0 : i32
    %c0_i32_0 = arith.constant 0 : i32
    %c0_i32_1 = arith.constant 0 : i32
    return %c0_i32, %c0_i32_0 : i32, i32
  }
  func.func @transform_5(%arg0: i32, %arg1: i32, %arg2: i32) -> (i32, i32, i32, i32) {
    %c0_i32 = arith.constant 0 : i32
    %c0_i32_0 = arith.constant 0 : i32
    return %arg0, %arg1, %arg2, %c0_i32 : i32, i32, i32, i32
  }
}

</mosaic_0001>

<llo_original>
// kernel: tpu_custom_call.1
$region0: #{tpu_custom_call.1}
  #allocation0 [shape = 'u32[]', space=smem, size = 0x4, offset = 0x4, fixed_abs, tag = 'smem constant byte address 0x4 - core index']
  #allocation1 [shape = 'u32[72,128]{1,0:T(1,128)}', space=vmem, size = 0x9000, scoped, tag = 'internal scratch']
  #allocation2 [shape = 'f32[64,4]{1,0:T(8,128)}', space=vmem, size = 0x8000, scoped, tag = 'scratch operand']
  %s0 = inlined_call_operand.hbm [shape: f32[2,8,4,32], index: 0, kind: input, shape index: {}]
  %s1 = inlined_call_operand.hbm [shape: f32[2,8,32], index: 1, kind: input, shape index: {}]
  %s2 = inlined_call_operand.hbm [shape: f32[2,8,32], index: 2, kind: input, shape index: {}]
  %s3 = inlined_call_operand.hbm [shape: f32[2,8,32], index: 3, kind: input, shape index: {}]
  %s4 = inlined_call_operand.hbm [shape: f32[4,32], index: 4, kind: input, shape index: {}]
  %s5 = inlined_call_operand.hbm [shape: f32[2,8,8,32], index: 5, kind: output, shape index: {}]
  %s6 = sld [smem:[#allocation0]]
  $region73: #{tpu_custom_call.1} parent=0
    _
  %s8 = ssub.s32 1, %s6
  %s9 = scalar_select 0, %s8, %s6
  $region1: #{tpu_custom_call.1} parent=0
    #allocation3 [shape = 'u8[32768]{0}', space=vmem, size = 0x8000, scoped, tag = 'input window, operand 0']
    #allocation4 [shape = 's32[2]{0}', space=sflag, size = 0x8, scoped, tag = 'scoped memory for tpu_custom_call.1']
    #allocation5 [shape = 's32[2]{0}', space=sflag, size = 0x8, scoped, tag = 'scoped memory for tpu_custom_call.1']
    #allocation6 [shape = 'u8[8192]{0}', space=vmem, size = 0x2000, scoped, tag = 'input window, operand 1']
    #allocation7 [shape = 's32[2]{0}', space=sflag, size = 0x8, scoped, tag = 'scoped memory for tpu_custom_call.1']
    #allocation8 [shape = 'u8[8192]{0}', space=vmem, size = 0x2000, scoped, tag = 'input window, operand 2']
    #allocation9 [shape = 'u8[8192]{0}', space=vmem, size = 0x2000, scoped, tag = 'input window, operand 3']
    #allocation10 [shape = 's32[2]{0}', space=sflag, size = 0x8, scoped, tag = 'scoped memory for tpu_custom_call.1']
    #allocation11 [shape = 'u8[2048]{0}', space=vmem, size = 0x800, scoped, tag = 'input window, operand 4, single buffered']
    #allocation12 [shape = 'u8[65536]{0}', space=vmem, size = 0x10000, scoped, tag = 'output window, operand 0']
    %10 = vsyncpa [#allocation4], 0
    %s11 = scalar_lea.sflag [#allocation4], 1
    %12 = vsyncpa %s11, 0
    %13 = vsyncpa [#allocation7], 0
    %s14 = scalar_lea.sflag [#allocation7], 1
    %15 = vsyncpa %s14, 0
    %16 = vsyncpa [#allocation10], 0
    %s17 = scalar_lea.sflag [#allocation10], 1
    %18 = vsyncpa %s17, 0
    %19 = vsyncpa [#allocation5], 0
    %s20 = scalar_lea.sflag [#allocation5], 1
    %21 = vsyncpa %s20, 0
    loop: start=0, step=1, limit=4
    $region2: #{tpu_custom_call.1} parent=1 // loop_pre_header
      _
    $region3: #{tpu_custom_call.1} parent=1 // loop_header
      %s23 = sphi 0, %s27
      %p24 = scmp.ge.s32.totalorder %s23, 4
      %s30 = sphi 0, %s49
      %s31 = sphi 0, %s45
      %s32 = sphi 0, %s41
      %s33 = sphi 0, %s30
      %s34 = sphi 0, %s31
      %s35 = sphi 0, %s32
      %s36 = sphi 0, %s33
      %s37 = sphi 0, %s34
      %s38 = sphi 0, %s35
      %s54 = sphi 0, %s56
      %s57 = sphi 0, %s54
      %s58 = sphi 0, %s57
      %s74 = sphi 0, %s58
      %s82 = sphi 0, %s84
      %s85 = sphi 0, %s82
      %s86 = sphi 0, %s85
      %s102 = sphi 0, %s86
      %s110 = sphi 0, %s112
      %s113 = sphi 0, %s110
      %s114 = sphi 0, %s113
      %s130 = sphi 0, %s114
      %s138 = sphi 0, %s140
      %s141 = sphi 0, %s138
      %s142 = sphi 0, %s141
      %s158 = sphi 0, %s142
      %s162 = sphi 0, %s162
      %s164 = sphi 0, %s162
      %s165 = sphi 0, %s164
      %s179 = sphi 0, %s165
      %s189 = sphi 0, %s191
      %s192 = sphi 0, %s189
      %s193 = sphi 0, %s192
      %s209 = sphi 0, %s193
    $region4: #{tpu_custom_call.1} parent=1 // loop_header_branch
      %26 = sbr.rel (%p24) target = $region8
    $region5: #{tpu_custom_call.1} parent=1 // loop_body
      %s28 = ssub.s32 %s23, 1
      %s29 = ssub.s32 %s23, 2
      %s39 = sadd.s32 1, %s32
      %p40 = scmp.ge.s32.totalorder %s39, 1
      %s41 = scalar_select %p40, 0, %s39
      %s42 = sadd.s32 1, %s31
      %s43 = scalar_select %p40, %s42, %s31
      %p44 = scmp.ge.s32.totalorder %s43, 1
      %s45 = scalar_select %p44, 0, %s43
      %s46 = sadd.s32 1, %s30
      %s47 = scalar_select %p44, %s46, %s30
      %p48 = scmp.ge.s32.totalorder %s47, 2
      %s49 = scalar_select %p48, 0, %s47
      %s50 = ssub.s32 %s30, %s49
      %s51 = ssub.s32 %s31, %s45
      %s52 = sor.u32 %s50, %s51
      %p53 = scmp.eq.s32.totalorder %s52, 0
      %s55 = sadd.s32 %s54, 1
      %s56 = scalar_select %p53, %s54, %s55
      %p59 = pneg %p53
      %p60 = scmp.eq.s32.totalorder %s23, 1
      %p61 = por %p59, %p60
      %p62 = scmp.ne.s32.totalorder %s54, %s57
      %p63 = scmp.eq.s32.totalorder %s23, 0
      %p64 = por %p62, %p63
      %p65 = scmp.ne.s32.totalorder %s54, %s57
      %p66 = scmp.eq.s32.totalorder %s28, 1
      %p67 = por %p65, %p66
      %p68 = scmp.ne.s32.totalorder %s57, %s58
      %p69 = scmp.eq.s32.totalorder %s28, 0
      %p70 = por %p68, %p69
      %p71 = scmp.ne.s32.totalorder %s57, %s58
      %p72 = scmp.eq.s32.totalorder %s29, 1
      %p73 = por %p71, %p72
      %p75 = scmp.ne.s32.totalorder %s58, %s74
      %p76 = scmp.eq.s32.totalorder %s29, 0
      %p77 = por %p75, %p76
      %s78 = ssub.s32 %s30, %s49
      %s79 = ssub.s32 %s31, %s45
      %s80 = sor.u32 %s78, %s79
      %p81 = scmp.eq.s32.totalorder %s80, 0
      %s83 = sadd.s32 %s82, 1
      %s84 = scalar_select %p81, %s82, %s83
      %p87 = pneg %p81
      %p88 = scmp.eq.s32.totalorder %s23, 1
      %p89 = por %p87, %p88
      %p90 = scmp.ne.s32.totalorder %s82, %s85
      %p91 = scmp.eq.s32.totalorder %s23, 0
      %p92 = por %p90, %p91
      %p93 = scmp.ne.s32.totalorder %s82, %s85
      %p94 = scmp.eq.s32.totalorder %s28, 1
      %p95 = por %p93, %p94
      %p96 = scmp.ne.s32.totalorder %s85, %s86
      %p97 = scmp.eq.s32.totalorder %s28, 0
      %p98 = por %p96, %p97
      %p99 = scmp.ne.s32.totalorder %s85, %s86
      %p100 = scmp.eq.s32.totalorder %s29, 1
      %p101 = por %p99, %p100
      %p103 = scmp.ne.s32.totalorder %s86, %s102
      %p104 = scmp.eq.s32.totalorder %s29, 0
      %p105 = por %p103, %p104
      %s106 = ssub.s32 %s30, %s49
      %s107 = ssub.s32 %s32, %s41
      %s108 = sor.u32 %s106, %s107
      %p109 = scmp.eq.s32.totalorder %s108, 0
      %s111 = sadd.s32 %s110, 1
      %s112 = scalar_select %p109, %s110, %s111
      %p115 = pneg %p109
      %p116 = scmp.eq.s32.totalorder %s23, 1
      %p117 = por %p115, %p116
      %p118 = scmp.ne.s32.totalorder %s110, %s113
      %p119 = scmp.eq.s32.totalorder %s23, 0
      %p120 = por %p118, %p119
      %p121 = scmp.ne.s32.totalorder %s110, %s113
      %p122 = scmp.eq.s32.totalorder %s28, 1
      %p123 = por %p121, %p122
      %p124 = scmp.ne.s32.totalorder %s113, %s114
      %p125 = scmp.eq.s32.totalorder %s28, 0
      %p126 = por %p124, %p125
      %p127 = scmp.ne.s32.totalorder %s113, %s114
      %p128 = scmp.eq.s32.totalorder %s29, 1
      %p129 = por %p127, %p128
      %p131 = scmp.ne.s32.totalorder %s114, %s130
      %p132 = scmp.eq.s32.totalorder %s29, 0
      %p133 = por %p131, %p132
      %s134 = ssub.s32 %s30, %s49
      %s135 = ssub.s32 %s32, %s41
      %s136 = sor.u32 %s134, %s135
      %p137 = scmp.eq.s32.totalorder %s136, 0
      %s139 = sadd.s32 %s138, 1
      %s140 = scalar_select %p137, %s138, %s139
      %p143 = pneg %p137
      %p144 = scmp.eq.s32.totalorder %s23, 1
      %p145 = por %p143, %p144
      %p146 = scmp.ne.s32.totalorder %s138, %s141
      %p147 = scmp.eq.s32.totalorder %s23, 0
      %p148 = por %p146, %p147
      %p149 = scmp.ne.s32.totalorder %s138, %s141
      %p150 = scmp.eq.s32.totalorder %s28, 1
      %p151 = por %p149, %p150
      %p152 = scmp.ne.s32.totalorder %s141, %s142
      %p153 = scmp.eq.s32.totalorder %s28, 0
      %p154 = por %p152, %p153
      %p155 = scmp.ne.s32.totalorder %s141, %s142
      %p156 = scmp.eq.s32.totalorder %s29, 1
      %p157 = por %p155, %p156
      %p159 = scmp.ne.s32.totalorder %s142, %s158
      %p160 = scmp.eq.s32.totalorder %s29, 0
      %p161 = por %p159, %p160
      %s163 = sadd.s32 %s162, 1
      %p166 = scmp.eq.s32.totalorder %s23, 1
      %p167 = scmp.ne.s32.totalorder %s162, %s164
      %p168 = scmp.eq.s32.totalorder %s23, 0
      %p169 = por %p167, %p168
      %p170 = scmp.ne.s32.totalorder %s162, %s164
      %p171 = scmp.eq.s32.totalorder %s28, 1
      %p172 = por %p170, %p171
      %p173 = scmp.ne.s32.totalorder %s164, %s165
      %p174 = scmp.eq.s32.totalorder %s28, 0
      %p175 = por %p173, %p174
      %p176 = scmp.ne.s32.totalorder %s164, %s165
      %p177 = scmp.eq.s32.totalorder %s29, 1
      %p178 = por %p176, %p177
      %p180 = scmp.ne.s32.totalorder %s165, %s179
      %p181 = scmp.eq.s32.totalorder %s29, 0
      %p182 = por %p180, %p181
      %s183 = ssub.s32 %s30, %s49
      %s184 = ssub.s32 %s31, %s45
      %s185 = sor.u32 %s183, %s184
      %s186 = ssub.s32 %s32, %s41
      %s187 = sor.u32 %s185, %s186
      %p188 = scmp.eq.s32.totalorder %s187, 0
      %s190 = sadd.s32 %s189, 1
      %s191 = scalar_select %p188, %s189, %s190
      %p194 = pneg %p188
      %p195 = scmp.eq.s32.totalorder %s23, 1
      %p196 = por %p194, %p195
      %p197 = scmp.ne.s32.totalorder %s189, %s192
      %p198 = scmp.eq.s32.totalorder %s23, 0
      %p199 = por %p197, %p198
      %p200 = scmp.ne.s32.totalorder %s189, %s192
      %p201 = scmp.eq.s32.totalorder %s28, 1
      %p202 = por %p200, %p201
      %p203 = scmp.ne.s32.totalorder %s192, %s193
      %p204 = scmp.eq.s32.totalorder %s28, 0
      %p205 = por %p203, %p204
      %p206 = scmp.ne.s32.totalorder %s192, %s193
      %p207 = scmp.eq.s32.totalorder %s29, 1
      %p208 = por %p206, %p207
      %p210 = scmp.ne.s32.totalorder %s193, %s209
      %p211 = scmp.eq.s32.totalorder %s29, 0
      %p212 = por %p210, %p211
      %p213 = scmp.le.s32.totalorder 1, %s23
      %p214 = scmp.lt.s32.totalorder %s23, 3
      %p215 = pnand %p213, %p214
      %p216 = pneg %p215
      // Predicated region
      $region9: #{tpu_custom_call.1} parent=5 // pred_check
        _
      $region10: #{tpu_custom_call.1} parent=5 // pred_check_branch
        %218 = sbr.rel (%p215) target = $region12
      $region11: #{tpu_custom_call.1} parent=5 // pred_region
        %s219 = ssub.s32 %s23, 1
        // Predicated region
        $region13: #{tpu_custom_call.1} parent=11 // pred_check
          %p220 = pneg %p175
        $region14: #{tpu_custom_call.1} parent=11 // pred_check_branch
          %222 = sbr.rel (%p220) target = $region16
        $region15: #{tpu_custom_call.1} parent=11 // pred_region
          %224 = vsyncadd [#allocation10], 0
          %s226 = sshll.u32 %s4, 4
          %s227 = int_to_ptr.hbm [resolvable:$true] %s226
          %s228 = sshll.u32 [#allocation11], 4
          %s229 = int_to_ptr.vmem [resolvable:$true] %s228
          %231 = dma.hbm_to_vmem [thread:$0]  %s227, 64, %s229, [#allocation10]
        $region16: #{tpu_custom_call.1} parent=11 // pred_fallthru
          _
      $region12: #{tpu_custom_call.1} parent=5 // pred_fallthru
        _
      %p232 = scmp.lt.s32.totalorder %s23, 2
      // Predicated region
      $region17: #{tpu_custom_call.1} parent=5 // pred_check
        %p233 = pneg %p232
      $region18: #{tpu_custom_call.1} parent=5 // pred_check_branch
        %235 = sbr.rel (%p233) target = $region20
      $region19: #{tpu_custom_call.1} parent=5 // pred_region
        // Predicated region
        $region21: #{tpu_custom_call.1} parent=19 // pred_check
          %p236 = pneg %p64
        $region22: #{tpu_custom_call.1} parent=19 // pred_check_branch
          %238 = sbr.rel (%p236) target = $region24
        $region23: #{tpu_custom_call.1} parent=19 // pred_region
          %s239 = sand.u32 %s54, 1
          %s240 = scalar_lea.sflag [#allocation4], %s239
          %s241 = sand.u32 %s54, 1
          %s242 = smul.addr %s241, 32
          %s243 = scalar_lea.vmem [#allocation3], %s242
          %s244 = smul.u32 8, %s31
          %246 = vsyncadd %s240, 0
          %s247 = smul.addr %s30, 8
          %s248 = sadd.s32 %s244, %s247
          %s249 = smul.addr %s248, 4
          %s250 = scalar_lea.hbm %s0, %s249
          %s251 = sshll.u32 %s250, 4
          %s252 = int_to_ptr.hbm [resolvable:$true] %s251
          %s253 = sshll.u32 %s243, 4
          %s254 = int_to_ptr.vmem [resolvable:$true] %s253
          %259 = dma.hbm_to_vmem [thread:$0]  %s252, 512, %s254, %s240, 64, 64, 4
        $region24: #{tpu_custom_call.1} parent=19 // pred_fallthru
          _
        // Predicated region
        $region25: #{tpu_custom_call.1} parent=19 // pred_check
          %p260 = pneg %p92
        $region26: #{tpu_custom_call.1} parent=19 // pred_check_branch
          %262 = sbr.rel (%p260) target = $region28
        $region27: #{tpu_custom_call.1} parent=19 // pred_region
          %s263 = sand.u32 %s23, 1
          %s264 = scalar_lea.sflag [#allocation7], %s263
          %s265 = sand.u32 %s82, 1
          %s266 = smul.addr %s265, 8
          %s267 = scalar_lea.vmem [#allocation6], %s266
          %269 = vsyncadd %s264, 0
          %s270 = sadd.s32 %s31, %s30
          %s271 = smul.addr %s270, 8
          %s272 = scalar_lea.hbm %s1, %s271
          %s274 = sshll.u32 %s272, 4
          %s275 = int_to_ptr.hbm [resolvable:$true] %s274
          %s276 = sshll.u32 %s267, 4
          %s277 = int_to_ptr.vmem [resolvable:$true] %s276
          %279 = dma.hbm_to_vmem [thread:$0]  %s275, 128, %s277, %s264
        $region28: #{tpu_custom_call.1} parent=19 // pred_fallthru
          _
        // Predicated region
        $region29: #{tpu_custom_call.1} parent=19 // pred_check
          %p280 = pneg %p120
        $region30: #{tpu_custom_call.1} parent=19 // pred_check_branch
          %282 = sbr.rel (%p280) target = $region32
        $region31: #{tpu_custom_call.1} parent=19 // pred_region
          %s283 = sand.u32 %s23, 1
          %s284 = scalar_lea.sflag [#allocation7], %s283
          %s285 = sand.u32 %s110, 1
          %s286 = smul.addr %s285, 8
          %s287 = scalar_lea.vmem [#allocation8], %s286
          %289 = vsyncadd %s284, 0
          %s290 = sadd.s32 %s32, %s30
          %s291 = smul.addr %s290, 8
          %s292 = scalar_lea.hbm %s2, %s291
          %s294 = sshll.u32 %s292, 4
          %s295 = int_to_ptr.hbm [resolvable:$true] %s294
          %s296 = sshll.u32 %s287, 4
          %s297 = int_to_ptr.vmem [resolvable:$true] %s296
          %299 = dma.hbm_to_vmem [thread:$0]  %s295, 128, %s297, %s284
        $region32: #{tpu_custom_call.1} parent=19 // pred_fallthru
          _
        // Predicated region
        $region33: #{tpu_custom_call.1} parent=19 // pred_check
          %p300 = pneg %p148
        $region34: #{tpu_custom_call.1} parent=19 // pred_check_branch
          %302 = sbr.rel (%p300) target = $region36
        $region35: #{tpu_custom_call.1} parent=19 // pred_region
          %s303 = sand.u32 %s23, 1
          %s304 = scalar_lea.sflag [#allocation10], %s303
          %s305 = sand.u32 %s138, 1
          %s306 = smul.addr %s305, 8
          %s307 = scalar_lea.vmem [#allocation9], %s306
          %309 = vsyncadd %s304, 0
          %s310 = sadd.s32 %s32, %s30
          %s311 = smul.addr %s310, 8
          %s312 = scalar_lea.hbm %s3, %s311
          %s314 = sshll.u32 %s312, 4
          %s315 = int_to_ptr.hbm [resolvable:$true] %s314
          %s316 = sshll.u32 %s307, 4
          %s317 = int_to_ptr.vmem [resolvable:$true] %s316
          %319 = dma.hbm_to_vmem [thread:$0]  %s315, 128, %s317, %s304
        $region36: #{tpu_custom_call.1} parent=19 // pred_fallthru
          _
      $region20: #{tpu_custom_call.1} parent=5 // pred_fallthru
        _
      %p320 = scmp.le.s32.totalorder 1, %s23
      %p321 = scmp.lt.s32.totalorder %s23, 3
      %p322 = pnand %p320, %p321
      %p323 = pneg %p322
      // Predicated region
      $region37: #{tpu_custom_call.1} parent=5 // pred_check
        _
      $region38: #{tpu_custom_call.1} parent=5 // pred_check_branch
        %325 = sbr.rel (%p322) target = $region40
      $region39: #{tpu_custom_call.1} parent=5 // pred_region
        %s326 = ssub.s32 %s23, 1
        %s327 = sand.u32 %s57, 1
        %s328 = scalar_lea.sflag [#allocation4], %s327
        %s329 = sand.u32 %s57, 1
        %s330 = smul.addr %s329, 32
        %s331 = scalar_lea.vmem [#allocation3], %s330
        // Predicated region
        $region41: #{tpu_custom_call.1} parent=39 // pred_check
          %p332 = pneg %p70
        $region42: #{tpu_custom_call.1} parent=39 // pred_check_branch
          %334 = sbr.rel (%p332) target = $region44
        $region43: #{tpu_custom_call.1} parent=39 // pred_region
          %336 = dma.done %s328, 512
        $region44: #{tpu_custom_call.1} parent=39 // pred_fallthru
          _
        %s337 = sand.u32 %s28, 1
        %s338 = scalar_lea.sflag [#allocation7], %s337
        %s339 = sand.u32 %s85, 1
        %s340 = smul.addr %s339, 8
        %s341 = scalar_lea.vmem [#allocation6], %s340
        // Predicated region
        $region45: #{tpu_custom_call.1} parent=39 // pred_check
          %p342 = pneg %p98
        $region46: #{tpu_custom_call.1} parent=39 // pred_check_branch
          %344 = sbr.rel (%p342) target = $region48
        $region47: #{tpu_custom_call.1} parent=39 // pred_region
          %346 = dma.done %s338, 128
        $region48: #{tpu_custom_call.1} parent=39 // pred_fallthru
          _
        %s347 = sand.u32 %s28, 1
        %s348 = scalar_lea.sflag [#allocation7], %s347
        %s349 = sand.u32 %s113, 1
        %s350 = smul.addr %s349, 8
        %s351 = scalar_lea.vmem [#allocation8], %s350
        // Predicated region
        $region49: #{tpu_custom_call.1} parent=39 // pred_check
          %p352 = pneg %p126
        $region50: #{tpu_custom_call.1} parent=39 // pred_check_branch
          %354 = sbr.rel (%p352) target = $region52
        $region51: #{tpu_custom_call.1} parent=39 // pred_region
          %356 = dma.done %s348, 128
        $region52: #{tpu_custom_call.1} parent=39 // pred_fallthru
          _
        %s357 = sand.u32 %s28, 1
        %s358 = scalar_lea.sflag [#allocation10], %s357
        %s359 = sand.u32 %s141, 1
        %s360 = smul.addr %s359, 8
        %s361 = scalar_lea.vmem [#allocation9], %s360
        // Predicated region
        $region53: #{tpu_custom_call.1} parent=39 // pred_check
          %p362 = pneg %p154
        $region54: #{tpu_custom_call.1} parent=39 // pred_check_branch
          %364 = sbr.rel (%p362) target = $region56
        $region55: #{tpu_custom_call.1} parent=39 // pred_region
          %366 = dma.done %s358, 128
        $region56: #{tpu_custom_call.1} parent=39 // pred_fallthru
          _
        // Predicated region
        $region57: #{tpu_custom_call.1} parent=39 // pred_check
          %p367 = pneg %p175
        $region58: #{tpu_custom_call.1} parent=39 // pred_check_branch
          %369 = sbr.rel (%p367) target = $region60
        $region59: #{tpu_custom_call.1} parent=39 // pred_region
          %371 = dma.done [#allocation10], 64
        $region60: #{tpu_custom_call.1} parent=39 // pred_fallthru
          _
        %s372 = sand.u32 %s57, 1
        %s373 = scalar_lea.sflag [#allocation4], %s372
        %s374 = sand.u32 %s57, 1
        %s375 = smul.addr %s374, 32
        %s376 = scalar_lea.vmem [#allocation3], %s375
        %p377 = pneg %p70
        %p378 = pneg %p67
        %s379 = sand.u32 %s28, 1
        %s380 = scalar_lea.sflag [#allocation7], %s379
        %s381 = sand.u32 %s85, 1
        %s382 = smul.addr %s381, 8
        %s383 = scalar_lea.vmem [#allocation6], %s382
        %p384 = pneg %p98
        %p385 = pneg %p95
        %s386 = sand.u32 %s28, 1
        %s387 = scalar_lea.sflag [#allocation7], %s386
        %s388 = sand.u32 %s113, 1
        %s389 = smul.addr %s388, 8
        %s390 = scalar_lea.vmem [#allocation8], %s389
        %p391 = pneg %p126
        %p392 = pneg %p123
        %s393 = sand.u32 %s28, 1
        %s394 = scalar_lea.sflag [#allocation10], %s393
        %s395 = sand.u32 %s141, 1
        %s396 = smul.addr %s395, 8
        %s397 = scalar_lea.vmem [#allocation9], %s396
        %p398 = pneg %p154
        %p399 = pneg %p151
        %p400 = pneg %p175
        %p401 = pneg %p172
        %p402 = pneg %p205
        %p403 = pneg %p202
        %s404 = sand.u32 %s192, 1
        %s405 = scalar_lea.sflag [#allocation5], %s404
        %s406 = sand.u32 %s192, 1
        %s407 = smul.addr %s406, 64
        %s408 = scalar_lea.vmem [#allocation12], %s407
        %s409 = smul.u32 8, %s34
        %s410 = smul.u32 8, %s34
        %v411 = vld [vmem:[%s361] sm:$0xff]
        %v412 = vld [vmem:[#allocation11] sm:$0xf]
        %v413 = vld [vmem:[%s331] sm:$0xf]
        %vm414 = vcmask 261120
        %v416 = vsel %vm414, %v411, 0
        %v419 = vsel %vm414, %v413, 0
        %421 = vmatpush.xpose.msra.mxu0 0.0
        %422 = vmatpush.xpose.msra.mxu0 0.0
        %423 = vmatpush.xpose.msra.mxu0 0.0
        %424 = vmatpush.xpose.msra.mxu0 0.0
        %425 = vmatpush.xpose.msra.mxu0 0.0
        %426 = vmatpush.xpose.msra.mxu0 0.0
        %427 = vmatpush.xpose.msra.mxu0 0.0
        %428 = vmatpush.xpose.msra.mxu0 0.0
        %429 = vmatpush.xpose.msra.mxu0 0.0
        %430 = vmatpush.xpose.msra.mxu0 0.0
        %431 = vmatpush.xpose.msra.mxu0 0.0
        %432 = vmatpush.xpose.msra.mxu0 0.0
        %433 = vmatpush.xpose.msra.mxu0 0.0
        %434 = vmatpush.xpose.msra.mxu0 0.0
        %435 = vmatpush.xpose.msra.mxu0 0.0
        %436 = vmatpush.xpose.msra.mxu0 %v419
        %437 = vmatmul.f32.gmra.mxu0 %v416
        %v438 = vpop.f32.mrf.mxu0
        %v439 = vadd.f32 0.0, %v438
        %440 = vdwg.mxu0
        %vm441 = vcmask 31744
        %442 = vst.msk [vmem:[#allocation2] sm:$0xff] %vm441, %v439
        %s443 = scalar_lea.vmem %s331, 4 [#allocation3]
        %v444 = vld [vmem:[%s443] sm:$0xf]
        %v446 = vsel %vm414, %v444, 0
        %448 = vmatpush.xpose.msra.mxu0 0.0
        %449 = vmatpush.xpose.msra.mxu0 0.0
        %450 = vmatpush.xpose.msra.mxu0 0.0
        %451 = vmatpush.xpose.msra.mxu0 0.0
        %452 = vmatpush.xpose.msra.mxu0 0.0
        %453 = vmatpush.xpose.msra.mxu0 0.0
        %454 = vmatpush.xpose.msra.mxu0 0.0
        %455 = vmatpush.xpose.msra.mxu0 0.0
        %456 = vmatpush.xpose.msra.mxu0 0.0
        %457 = vmatpush.xpose.msra.mxu0 0.0
        %458 = vmatpush.xpose.msra.mxu0 0.0
        %459 = vmatpush.xpose.msra.mxu0 0.0
        %460 = vmatpush.xpose.msra.mxu0 0.0
        %461 = vmatpush.xpose.msra.mxu0 0.0
        %462 = vmatpush.xpose.msra.mxu0 0.0
        %463 = vmatpush.xpose.msra.mxu0 %v446
        %464 = vmatmul.f32.gmra.mxu0 %v416
        %v465 = vpop.f32.mrf.mxu0
        %v466 = vadd.f32 0.0, %v465
        %467 = vdwg.mxu0
        %468 = vst.msk [vmem:[#allocation2 + $0x8] sm:$0xff] %vm441, %v466
        %s469 = scalar_lea.vmem %s331, 8 [#allocation3]
        %v470 = vld [vmem:[%s469] sm:$0xf]
        %v472 = vsel %vm414, %v470, 0
        %474 = vmatpush.xpose.msra.mxu0 0.0
        %475 = vmatpush.xpose.msra.mxu0 0.0
        %476 = vmatpush.xpose.msra.mxu0 0.0
        %477 = vmatpush.xpose.msra.mxu0 0.0
        %478 = vmatpush.xpose.msra.mxu0 0.0
        %479 = vmatpush.xpose.msra.mxu0 0.0
        %480 = vmatpush.xpose.msra.mxu0 0.0
        %481 = vmatpush.xpose.msra.mxu0 0.0
        %482 = vmatpush.xpose.msra.mxu0 0.0
        %483 = vmatpush.xpose.msra.mxu0 0.0
        %484 = vmatpush.xpose.msra.mxu0 0.0
        %485 = vmatpush.xpose.msra.mxu0 0.0
        %486 = vmatpush.xpose.msra.mxu0 0.0
        %487 = vmatpush.xpose.msra.mxu0 0.0
        %488 = vmatpush.xpose.msra.mxu0 0.0
        %489 = vmatpush.xpose.msra.mxu0 %v472
        %490 = vmatmul.f32.gmra.mxu0 %v416
        %v491 = vpop.f32.mrf.mxu0
        %v492 = vadd.f32 0.0, %v491
        %493 = vdwg.mxu0
        %494 = vst.msk [vmem:[#allocation2 + $0x10] sm:$0xff] %vm441, %v492
        %s495 = scalar_lea.vmem %s331, 12 [#allocation3]
        %v496 = vld [vmem:[%s495] sm:$0xf]
        %v498 = vsel %vm414, %v496, 0
        %500 = vmatpush.xpose.msra.mxu0 0.0
        %501 = vmatpush.xpose.msra.mxu0 0.0
        %502 = vmatpush.xpose.msra.mxu0 0.0
        %503 = vmatpush.xpose.msra.mxu0 0.0
        %504 = vmatpush.xpose.msra.mxu0 0.0
        %505 = vmatpush.xpose.msra.mxu0 0.0
        %506 = vmatpush.xpose.msra.mxu0 0.0
        %507 = vmatpush.xpose.msra.mxu0 0.0
        %508 = vmatpush.xpose.msra.mxu0 0.0
        %509 = vmatpush.xpose.msra.mxu0 0.0
        %510 = vmatpush.xpose.msra.mxu0 0.0
        %511 = vmatpush.xpose.msra.mxu0 0.0
        %512 = vmatpush.xpose.msra.mxu0 0.0
        %513 = vmatpush.xpose.msra.mxu0 0.0
        %514 = vmatpush.xpose.msra.mxu0 0.0
        %515 = vmatpush.xpose.msra.mxu0 %v498
        %516 = vmatmul.f32.gmra.mxu0 %v416
        %v517 = vpop.f32.mrf.mxu0
        %v518 = vadd.f32 0.0, %v517
        %519 = vdwg.mxu0
        %520 = vst.msk [vmem:[#allocation2 + $0x18] sm:$0xff] %vm441, %v518
        %s521 = scalar_lea.vmem %s331, 16 [#allocation3]
        %v522 = vld [vmem:[%s521] sm:$0xf]
        %v524 = vsel %vm414, %v522, 0
        %526 = vmatpush.xpose.msra.mxu0 0.0
        %527 = vmatpush.xpose.msra.mxu0 0.0
        %528 = vmatpush.xpose.msra.mxu0 0.0
        %529 = vmatpush.xpose.msra.mxu0 0.0
        %530 = vmatpush.xpose.msra.mxu0 0.0
        %531 = vmatpush.xpose.msra.mxu0 0.0
        %532 = vmatpush.xpose.msra.mxu0 0.0
        %533 = vmatpush.xpose.msra.mxu0 0.0
        %534 = vmatpush.xpose.msra.mxu0 0.0
        %535 = vmatpush.xpose.msra.mxu0 0.0
        %536 = vmatpush.xpose.msra.mxu0 0.0
        %537 = vmatpush.xpose.msra.mxu0 0.0
        %538 = vmatpush.xpose.msra.mxu0 0.0
        %539 = vmatpush.xpose.msra.mxu0 0.0
        %540 = vmatpush.xpose.msra.mxu0 0.0
        %541 = vmatpush.xpose.msra.mxu0 %v524
        %542 = vmatmul.f32.gmra.mxu0 %v416
        %v543 = vpop.f32.mrf.mxu0
        %v544 = vadd.f32 0.0, %v543
        %545 = vdwg.mxu0
        %546 = vst.msk [vmem:[#allocation2 + $0x20] sm:$0xff] %vm441, %v544
        %s547 = scalar_lea.vmem %s331, 20 [#allocation3]
        %v548 = vld [vmem:[%s547] sm:$0xf]
        %v550 = vsel %vm414, %v548, 0
        %552 = vmatpush.xpose.msra.mxu0 0.0
        %553 = vmatpush.xpose.msra.mxu0 0.0
        %554 = vmatpush.xpose.msra.mxu0 0.0
        %555 = vmatpush.xpose.msra.mxu0 0.0
        %556 = vmatpush.xpose.msra.mxu0 0.0
        %557 = vmatpush.xpose.msra.mxu0 0.0
        %558 = vmatpush.xpose.msra.mxu0 0.0
        %559 = vmatpush.xpose.msra.mxu0 0.0
        %560 = vmatpush.xpose.msra.mxu0 0.0
        %561 = vmatpush.xpose.msra.mxu0 0.0
        %562 = vmatpush.xpose.msra.mxu0 0.0
        %563 = vmatpush.xpose.msra.mxu0 0.0
        %564 = vmatpush.xpose.msra.mxu0 0.0
        %565 = vmatpush.xpose.msra.mxu0 0.0
        %566 = vmatpush.xpose.msra.mxu0 0.0
        %567 = vmatpush.xpose.msra.mxu0 %v550
        %568 = vmatmul.f32.gmra.mxu0 %v416
        %v569 = vpop.f32.mrf.mxu0
        %v570 = vadd.f32 0.0, %v569
        %571 = vdwg.mxu0
        %572 = vst.msk [vmem:[#allocation2 + $0x28] sm:$0xff] %vm441, %v570
        %s573 = scalar_lea.vmem %s331, 24 [#allocation3]
        %v574 = vld [vmem:[%s573] sm:$0xf]
        %v576 = vsel %vm414, %v574, 0
        %578 = vmatpush.xpose.msra.mxu0 0.0
        %579 = vmatpush.xpose.msra.mxu0 0.0
        %580 = vmatpush.xpose.msra.mxu0 0.0
        %581 = vmatpush.xpose.msra.mxu0 0.0
        %582 = vmatpush.xpose.msra.mxu0 0.0
        %583 = vmatpush.xpose.msra.mxu0 0.0
        %584 = vmatpush.xpose.msra.mxu0 0.0
        %585 = vmatpush.xpose.msra.mxu0 0.0
        %586 = vmatpush.xpose.msra.mxu0 0.0
        %587 = vmatpush.xpose.msra.mxu0 0.0
        %588 = vmatpush.xpose.msra.mxu0 0.0
        %589 = vmatpush.xpose.msra.mxu0 0.0
        %590 = vmatpush.xpose.msra.mxu0 0.0
        %591 = vmatpush.xpose.msra.mxu0 0.0
        %592 = vmatpush.xpose.msra.mxu0 0.0
        %593 = vmatpush.xpose.msra.mxu0 %v576
        %594 = vmatmul.f32.gmra.mxu0 %v416
        %v595 = vpop.f32.mrf.mxu0
        %v596 = vadd.f32 0.0, %v595
        %597 = vdwg.mxu0
        %598 = vst.msk [vmem:[#allocation2 + $0x30] sm:$0xff] %vm441, %v596
        %s599 = scalar_lea.vmem %s331, 28 [#allocation3]
        %v600 = vld [vmem:[%s599] sm:$0xf]
        %v602 = vsel %vm414, %v600, 0
        %604 = vmatpush.xpose.msra.mxu0 0.0
        %605 = vmatpush.xpose.msra.mxu0 0.0
        %606 = vmatpush.xpose.msra.mxu0 0.0
        %607 = vmatpush.xpose.msra.mxu0 0.0
        %608 = vmatpush.xpose.msra.mxu0 0.0
        %609 = vmatpush.xpose.msra.mxu0 0.0
        %610 = vmatpush.xpose.msra.mxu0 0.0
        %611 = vmatpush.xpose.msra.mxu0 0.0
        %612 = vmatpush.xpose.msra.mxu0 0.0
        %613 = vmatpush.xpose.msra.mxu0 0.0
        %614 = vmatpush.xpose.msra.mxu0 0.0
        %615 = vmatpush.xpose.msra.mxu0 0.0
        %616 = vmatpush.xpose.msra.mxu0 0.0
        %617 = vmatpush.xpose.msra.mxu0 0.0
        %618 = vmatpush.xpose.msra.mxu0 0.0
        %619 = vmatpush.xpose.msra.mxu0 %v602
        %620 = vmatmul.f32.gmra.mxu0 %v416
        %v621 = vpop.f32.mrf.mxu0
        %v622 = vadd.f32 0.0, %v621
        %623 = vdwg.mxu0
        %624 = vst.msk [vmem:[#allocation2 + $0x38] sm:$0xff] %vm441, %v622
        %v625 = vld [vmem:[#allocation2] sm:$0xff]
        %v626 = vld [vmem:[#allocation2 + $0x8] sm:$0xff]
        %v627 = vld [vmem:[#allocation2 + $0x10] sm:$0xff]
        %v628 = vld [vmem:[#allocation2 + $0x18] sm:$0xff]
        %v629 = vld [vmem:[#allocation2 + $0x20] sm:$0xff]
        %v630 = vld [vmem:[#allocation2 + $0x28] sm:$0xff]
        %v631 = vld [vmem:[#allocation2 + $0x30] sm:$0xff]
        %v632 = vld [vmem:[#allocation2 + $0x38] sm:$0xff]
        %v634 = vsel %vm441, %v625, 0
        %v637 = vsel %vm441, %v626, 0
        %v640 = vsel %vm441, %v627, 0
        %v643 = vsel %vm441, %v628, 0
        %v646 = vsel %vm441, %v629, 0
        %v649 = vsel %vm441, %v630, 0
        %v652 = vsel %vm441, %v631, 0
        %v655 = vsel %vm441, %v632, 0
        %vm657 = vcmask 1043456
        %v659 = vsel %vm657, %v412, 0
        %661 = vmatpush.msra.mxu0 0.0
        %662 = vmatpush.msra.mxu0 0.0
        %663 = vmatpush.msra.mxu0 0.0
        %664 = vmatpush.msra.mxu0 0.0
        %665 = vmatpush.msra.mxu0 0.0
        %666 = vmatpush.msra.mxu0 0.0
        %667 = vmatpush.msra.mxu0 0.0
        %668 = vmatpush.msra.mxu0 0.0
        %669 = vmatpush.msra.mxu0 0.0
        %670 = vmatpush.msra.mxu0 0.0
        %671 = vmatpush.msra.mxu0 0.0
        %672 = vmatpush.msra.mxu0 0.0
        %673 = vmatpush.msra.mxu0 0.0
        %674 = vmatpush.msra.mxu0 0.0
        %675 = vmatpush.msra.mxu0 0.0
        %676 = vmatpush.msra.mxu0 %v659
        %677 = vmatmul.f32.gmra.mxu0 %v634
        %v678 = vpop.f32.mrf.mxu0
        %v679 = vadd.f32 0.0, %v678
        %680 = vmatmul.f32.gmra.mxu0 %v637
        %v681 = vpop.f32.mrf.mxu0
        %v682 = vadd.f32 0.0, %v681
        %683 = vmatmul.f32.gmra.mxu0 %v640
        %v684 = vpop.f32.mrf.mxu0
        %v685 = vadd.f32 0.0, %v684
        %686 = vmatmul.f32.gmra.mxu0 %v643
        %v687 = vpop.f32.mrf.mxu0
        %v688 = vadd.f32 0.0, %v687
        %689 = vmatmul.f32.gmra.mxu0 %v646
        %v690 = vpop.f32.mrf.mxu0
        %v691 = vadd.f32 0.0, %v690
        %692 = vmatmul.f32.gmra.mxu0 %v649
        %v693 = vpop.f32.mrf.mxu0
        %v694 = vadd.f32 0.0, %v693
        %695 = vmatmul.f32.gmra.mxu0 %v652
        %v696 = vpop.f32.mrf.mxu0
        %v697 = vadd.f32 0.0, %v696
        %698 = vmatmul.f32.gmra.mxu0 %v655
        %v699 = vpop.f32.mrf.mxu0
        %v700 = vadd.f32 0.0, %v699
        %701 = vdwg.mxu0
        %v702 = vld [vmem:[%s341] sm:$0xff]
        %v704 = vrot.slane %v702, 1
        %v705 = vrot.slane %v702, 2
        %v706 = vrot.slane %v702, 3
        %v707 = vrot.slane %v702, 4
        %v708 = vrot.slane %v702, 5
        %v709 = vrot.slane %v702, 6
        %v710 = vrot.slane %v702, 7
        %v711 = vperm.slane %v702, 0
        %v712 = vperm.slane %v704, 0
        %v713 = vperm.slane %v705, 0
        %v714 = vperm.slane %v706, 0
        %v715 = vperm.slane %v707, 0
        %v716 = vperm.slane %v708, 0
        %v717 = vperm.slane %v709, 0
        %v718 = vperm.slane %v710, 0
        %v727 = vadd.f32 %v679, %v711
        %v728 = vadd.f32 %v682, %v712
        %v729 = vadd.f32 %v685, %v713
        %v730 = vadd.f32 %v688, %v714
        %v731 = vadd.f32 %v691, %v715
        %v732 = vadd.f32 %v694, %v716
        %v733 = vadd.f32 %v697, %v717
        %v734 = vadd.f32 %v700, %v718
        %v735 = vld [vmem:[%s351] sm:$0xff]
        %v736 = vadd.f32 %v727, %v735
        %v737 = vadd.f32 %v728, %v735
        %v738 = vadd.f32 %v729, %v735
        %v739 = vadd.f32 %v730, %v735
        %v740 = vadd.f32 %v731, %v735
        %v741 = vadd.f32 %v732, %v735
        %v742 = vadd.f32 %v733, %v735
        %v743 = vadd.f32 %v734, %v735
        %v744 = vmax.f32 %v736, 0.0
        %v745 = vmax.f32 %v737, 0.0
        %v746 = vmax.f32 %v738, 0.0
        %v747 = vmax.f32 %v739, 0.0
        %v748 = vmax.f32 %v740, 0.0
        %v749 = vmax.f32 %v741, 0.0
        %v750 = vmax.f32 %v742, 0.0
        %v751 = vmax.f32 %v743, 0.0
        %752 = vst.msk [vmem:[%s408] sm:$0xff] %vm414, %v744
        %753 = vst.msk [vmem:[%s408 + $0x8] sm:$0xff] %vm414, %v745
        %754 = vst.msk [vmem:[%s408 + $0x10] sm:$0xff] %vm414, %v746
        %755 = vst.msk [vmem:[%s408 + $0x18] sm:$0xff] %vm414, %v747
        %756 = vst.msk [vmem:[%s408 + $0x20] sm:$0xff] %vm414, %v748
        %757 = vst.msk [vmem:[%s408 + $0x28] sm:$0xff] %vm414, %v749
        %758 = vst.msk [vmem:[%s408 + $0x30] sm:$0xff] %vm414, %v750
        %759 = vst.msk [vmem:[%s408 + $0x38] sm:$0xff] %vm414, %v751
        %s760 = sand.u32 %s192, 1
        %s761 = scalar_lea.sflag [#allocation5], %s760
        %s762 = sand.u32 %s192, 1
        %s763 = smul.addr %s762, 64
        %s764 = scalar_lea.vmem [#allocation12], %s763
        // Predicated region
        $region61: #{tpu_custom_call.1} parent=39 // pred_check
          %p765 = pneg %p202
        $region62: #{tpu_custom_call.1} parent=39 // pred_check_branch
          %767 = sbr.rel (%p765) target = $region64
        $region63: #{tpu_custom_call.1} parent=39 // pred_region
          %s768 = smul.u32 8, %s34
          %770 = vsyncadd %s761, 0
          %s771 = sadd.s32 %s35, %s768
          %s772 = smul.addr %s33, 8
          %s773 = sadd.s32 %s771, %s772
          %s774 = smul.addr %s773, 8
          %s775 = scalar_lea.hbm %s5, %s774
          %s776 = sshll.u32 %s764, 4
          %s777 = int_to_ptr.vmem [resolvable:$true] %s776
          %s778 = sshll.u32 %s775, 4
          %s779 = int_to_ptr.hbm [resolvable:$true] %s778
          %784 = dma.vmem_to_hbm [thread:$0]  %s777, 1024, %s779, %s761, 128, 128, 8
        $region64: #{tpu_custom_call.1} parent=39 // pred_fallthru
          _
      $region40: #{tpu_custom_call.1} parent=5 // pred_fallthru
        _
      %p785 = scmp.le.s32.totalorder 2, %s23
      // Predicated region
      $region65: #{tpu_custom_call.1} parent=5 // pred_check
        %p786 = pneg %p785
      $region66: #{tpu_custom_call.1} parent=5 // pred_check_branch
        %788 = sbr.rel (%p786) target = $region68
      $region67: #{tpu_custom_call.1} parent=5 // pred_region
        %s789 = ssub.s32 %s23, 2
        // Predicated region
        $region69: #{tpu_custom_call.1} parent=67 // pred_check
          %p790 = pneg %p208
        $region70: #{tpu_custom_call.1} parent=67 // pred_check_branch
          %792 = sbr.rel (%p790) target = $region72
        $region71: #{tpu_custom_call.1} parent=67 // pred_region
          %s793 = sand.u32 %s193, 1
          %s794 = scalar_lea.sflag [#allocation5], %s793
          %s795 = sand.u32 %s193, 1
          %s796 = smul.addr %s795, 64
          %s797 = scalar_lea.vmem [#allocation12], %s796
          %799 = dma.done %s794, 1024
        $region72: #{tpu_custom_call.1} parent=67 // pred_fallthru
          _
      $region68: #{tpu_custom_call.1} parent=5 // pred_fallthru
        _
    $region6: #{tpu_custom_call.1} parent=1 // loop_footer
      %s27 = sadd.s32 1, %s23
    $region7: #{tpu_custom_call.1} parent=1 // loop_footer_branch
      %22 = sbr.rel target = $region3
    $region8: #{tpu_custom_call.1} parent=1 // loop_exit
      _
    %800 = vsyncpa [#allocation4], 1
    %s801 = scalar_lea.sflag [#allocation4], 1
    %802 = vsyncpa %s801, 1
    %803 = vsyncpa [#allocation7], 1
    %s804 = scalar_lea.sflag [#allocation7], 1
    %805 = vsyncpa %s804, 1
    %806 = vsyncpa [#allocation10], 1
    %s807 = scalar_lea.sflag [#allocation10], 1
    %808 = vsyncpa %s807, 1
    %809 = vsyncpa [#allocation5], 1
    %s810 = scalar_lea.sflag [#allocation5], 1
    %811 = vsyncpa %s810, 1

</llo_original>
